<compile_context>
chip_gen: v7x
topology: tpu7x:2x2x1
jax: 0.10.0
libtpu: 0.0.40
codegen_flags: <defaults>
</compile_context>

<pallas_src>
import functools

import jax
import jax.numpy as jnp
from jax.experimental import pallas as pl
from jax.experimental.pallas import tpu as pltpu

_LANE = 128


def _round_up(n, m):
    return ((n + m - 1) // m) * m


def rbfnn_kernel(x_ref, cs_ref, gc2_ref, gamma_ref, w_ref, b_ref, out_ref,
                 acc_ref, *, scalar_head):
    cj = pl.program_id(1)

    @pl.when(cj == 0)
    def _():
        acc_ref[...] = jnp.zeros_like(acc_ref)

    x = x_ref[...].astype(jnp.float32)                       # (TB, D)
    x2 = jnp.sum(x * x, axis=-1, keepdims=True)              # (TB, 1)

    # cross = -2 * gamma_c * (x . c_c)  via the MXU (K = D is tiny but free).
    cross = jnp.dot(x, cs_ref[...],
                    preferred_element_type=jnp.float32)      # (TB, TC)

    # arg = gamma * ||x - c||^2 = cross + gamma*||c||^2 + gamma*||x||^2
    arg = cross + gc2_ref[...] + x2 * gamma_ref[...]          # (TB, TC)
    phi = jnp.exp(arg)                                        # (TB, TC)

    if scalar_head:
        # O == 1: lane-dense (1, TC) weight, VPU multiply + lane reduction.
        acc_ref[...] += jnp.sum(phi * w_ref[...], axis=-1, keepdims=True)
    else:
        # O > 1: weight pre-transposed to (TC, O) -> plain (M,K)x(K,N) matmul.
        acc_ref[...] += jnp.dot(phi, w_ref[...],
                                preferred_element_type=jnp.float32)

    @pl.when(cj == pl.num_programs(1) - 1)
    def _():
        out_ref[...] = (acc_ref[...] + b_ref[...]).astype(out_ref.dtype)


def rbfnn_forward(x, centers, log_sigmas, weight, bias, *,
                  tile_b=None, tile_c=None):
    """Forward pass matching the torch RBFNN module.

    x          : (B, D)
    centers    : (C, D)
    log_sigmas : (C,)
    weight     : (O, C)   torch nn.Linear layout
    bias       : (O,)
    returns (B, O) float32
    """
    B, D = x.shape
    C = centers.shape[0]
    O = weight.shape[0]

    # --- centers-axis tiling -------------------------------------------------
    if tile_c is None:
        tile_c = min(_round_up(C, _LANE), 1024)   # keep (TB,TC) temps small
    Cp = _round_up(C, tile_c)

    # --- batch-axis tiling ---------------------------------------------------
    if tile_b is None:
        tile_b = min(_round_up(B, 8), 1024)
        if B >= 256:
            # Ensure >= 2 grid steps along the "parallel" batch axis so both
            # v7x TensorCores get work (no-op for v5e/v6e single-TC chips).
            tile_b = min(tile_b, _round_up(-(-B // 2), 8))
    Bp = _round_up(B, tile_b)

    # --- parameter prep (tiny, constant w.r.t. the batch) --------------------
    centers_f = centers.astype(jnp.float32)
    gamma_c = -0.5 * jnp.exp(-2.0 * log_sigmas.astype(jnp.float32))   # (C,)
    c2 = jnp.sum(centers_f * centers_f, axis=-1)                      # (C,)

    # c_scaled[d, c] = -2 * gamma_c * centers[c, d]   (D, Cp), lane-aligned.
    cs = jnp.zeros((D, Cp), jnp.float32).at[:, :C].set(
        (centers_f * (-2.0 * gamma_c)[:, None]).T)
    gc2 = jnp.zeros((1, Cp), jnp.float32).at[0, :C].set(gamma_c * c2)
    gamma = jnp.zeros((1, Cp), jnp.float32).at[0, :C].set(gamma_c)

    if O == 1:
        w_arg = jnp.zeros((1, Cp), jnp.float32).at[0, :C].set(
            weight.astype(jnp.float32)[0])
        w_spec = pl.BlockSpec((1, tile_c), lambda i, j: (0, j))
    else:
        w_arg = jnp.zeros((Cp, O), jnp.float32).at[:C, :].set(
            weight.astype(jnp.float32).T)
        w_spec = pl.BlockSpec((tile_c, O), lambda i, j: (j, 0))

    b_2d = bias.astype(jnp.float32).reshape(1, O)

    x_p = x.astype(jnp.float32)
    if Bp != B:
        x_p = jnp.pad(x_p, ((0, Bp - B), (0, 0)))

    grid = (Bp // tile_b, Cp // tile_c)

    kernel = functools.partial(rbfnn_kernel, scalar_head=(O == 1))

    out = pl.pallas_call(
        kernel,
        out_shape=jax.ShapeDtypeStruct((Bp, O), jnp.float32),
        grid=grid,
        in_specs=[
            pl.BlockSpec((tile_b, D), lambda i, j: (i, 0)),    # x tile
            pl.BlockSpec((D, tile_c), lambda i, j: (0, j)),    # -2*gamma*c^T
            pl.BlockSpec((1, tile_c), lambda i, j: (0, j)),    # gamma*||c||^2
            pl.BlockSpec((1, tile_c), lambda i, j: (0, j)),    # gamma
            w_spec,                                            # linear weight
            pl.BlockSpec((1, O), lambda i, j: (0, 0)),         # bias
        ],
        out_specs=pl.BlockSpec((tile_b, O), lambda i, j: (i, 0)),
        scratch_shapes=[pltpu.VMEM((tile_b, O), jnp.float32)],
        compiler_params=pltpu.CompilerParams(
            dimension_semantics=("parallel", "arbitrary"),
            vmem_limit_bytes=48 * 1024 * 1024),
    )(x_p, cs, gc2, gamma, w_arg, b_2d)

    return out[:B]


def reference_forward(x, centers, log_sigmas, weight, bias):
    """Pure-JAX reference matching the PyTorch module semantics exactly."""
    diff = x[:, None, :] - centers[None, :, :]          # (B, C, D)
    dist = jnp.sum(diff * diff, axis=-1)                # (B, C)
    sigmas = jnp.exp(log_sigmas)                        # (C,)
    phi = jnp.exp(-dist / (2.0 * sigmas ** 2))          # (B, C)
    return phi @ weight.T + bias                        # (B, O)


if __name__ == "__main__":
    key = jax.random.PRNGKey(0)

    def make_params(k, D, C, O):
        k_c, k_w, k_b = jax.random.split(k, 3)
        centers = jax.random.normal(k_c, (C, D), dtype=jnp.float32)
        log_sigmas = jnp.zeros((C,), dtype=jnp.float32)
        bound = 1.0 / jnp.sqrt(jnp.float32(C))
        weight = jax.random.uniform(k_w, (O, C), minval=-bound, maxval=bound,
                                    dtype=jnp.float32)
        bias = jax.random.uniform(k_b, (O,), minval=-bound, maxval=bound,
                                  dtype=jnp.float32)
        return centers, log_sigmas, weight, bias

    # Case 1: canonical 1-D RBF net shapes (O == 1 scalar head, single C tile).
    B, D, C, O = 8, 4, 32, 1
    k1, k2 = jax.random.split(key)
    kx, kp = jax.random.split(k1)
    x = jax.random.normal(kx, (B, D), dtype=jnp.float32)
    centers, log_sigmas, weight, bias = make_params(kp, D, C, O)
    out = jax.block_until_ready(
        rbfnn_forward(x, centers, log_sigmas, weight, bias))
    ref = reference_forward(x, centers, log_sigmas, weight, bias)
    assert out.shape == (B, O), out.shape
    assert jnp.allclose(out, ref, atol=1e-4, rtol=1e-4), (out, ref)

    # Case 2: O > 1 matmul head, C not a multiple of the tile -> exercises the
    # centers-axis accumulator, lane padding, and multi-step batch grid.
    B, D, C, O = 16, 4, 160, 3
    kx, kp = jax.random.split(k2)
    x = jax.random.normal(kx, (B, D), dtype=jnp.float32)
    centers, log_sigmas, weight, bias = make_params(kp, D, C, O)
    out = jax.block_until_ready(
        rbfnn_forward(x, centers, log_sigmas, weight, bias,
                      tile_b=8, tile_c=128))
    ref = reference_forward(x, centers, log_sigmas, weight, bias)
    assert out.shape == (B, O), out.shape
    assert jnp.allclose(out, ref, atol=1e-4, rtol=1e-4), (out, ref)

    print("KERNEL_OK")
</pallas_src>

<mosaic_0001>
module attributes {stable_mosaic.version = 11 : i64} {
  func.func @rbfnn_kernel(%arg0: i32, %arg1: i32, %arg2: memref<8x4xf32, #tpu.memory_space<vmem>>, %arg3: memref<4x128xf32, #tpu.memory_space<vmem>>, %arg4: memref<1x128xf32, #tpu.memory_space<vmem>>, %arg5: memref<1x128xf32, #tpu.memory_space<vmem>>, %arg6: memref<1x128xf32, #tpu.memory_space<vmem>>, %arg7: memref<1x1xf32, #tpu.memory_space<vmem>>, %arg8: memref<8x1xf32, #tpu.memory_space<vmem>>, %arg9: memref<8x1xf32, #tpu.memory_space<vmem>>) attributes {dimension_semantics = [#tpu.dimension_semantics<parallel>, #tpu.dimension_semantics<arbitrary>], iteration_bounds = array<i64: 1, 1>, scalar_prefetch = 0 : i64, scratch_operands = 1 : i64, tpu.core_type = #tpu.core_type<tc>, window_params = [{transform_indices = @transform_0, window_bounds = array<i64: 8, 4>}, {transform_indices = @transform_1, window_bounds = array<i64: 4, 128>}, {transform_indices = @transform_2, window_bounds = array<i64: 1, 128>}, {transform_indices = @transform_3, window_bounds = array<i64: 1, 128>}, {transform_indices = @transform_4, window_bounds = array<i64: 1, 128>}, {pipeline_mode = #tpu.pipeline_mode<synchronous>, transform_indices = @transform_5, window_bounds = array<i64: 1, 1>}, {transform_indices = @transform_6, window_bounds = array<i64: 8, 1>}]} {
    %c0_i32 = arith.constant 0 : i32
    %0 = arith.cmpi eq, %arg1, %c0_i32 : i32
    %1 = arith.extui %0 : i1 to i32
    %c0_i32_0 = arith.constant 0 : i32
    %2 = arith.cmpi ne, %1, %c0_i32_0 : i32
    scf.if %2 {
      %cst_18 = arith.constant 0.000000e+00 : f32
      %29 = vector.broadcast %cst_18 : f32 to vector<8x1xf32>
      %c0_19 = arith.constant 0 : index
      %c0_20 = arith.constant 0 : index
      %30 = vector.load %arg9[%c0_19, %c0_20] : memref<8x1xf32, #tpu.memory_space<vmem>>, vector<8x1xf32>
      tpu.vector_store %arg9[%c0_19, %c0_20], %29 {strides = array<i32>} : memref<8x1xf32, #tpu.memory_space<vmem>>, vector<8x1xf32>,
    } else {
    }
    %c0 = arith.constant 0 : index
    %c0_1 = arith.constant 0 : index
    %3 = vector.load %arg2[%c0, %c0_1] : memref<8x4xf32, #tpu.memory_space<vmem>>, vector<8x4xf32>
    %4 = arith.mulf %3, %3 : vector<8x4xf32>
    %cst = arith.constant dense<0.000000e+00> : vector<8xf32>
    %5 = vector.multi_reduction <add>, %4, %cst [1] : vector<8x4xf32> to vector<8xf32>
    %6 = vector.shape_cast %5 : vector<8xf32> to vector<8x1xf32>
    %c0_2 = arith.constant 0 : index
    %c0_3 = arith.constant 0 : index
    %7 = vector.load %arg3[%c0_2, %c0_3] : memref<4x128xf32, #tpu.memory_space<vmem>>, vector<4x128xf32>
    %cst_4 = arith.constant dense<0.000000e+00> : vector<8x128xf32>
    %8 = tpu.matmul %3, %7, %cst_4 {dimension_numbers = #tpu.dot_dimension_numbers<[1], [0], [0], [1], [0, 0, 1, 1], [], []>} : vector<8x4xf32>, vector<4x128xf32>, vector<8x128xf32> -> vector<8x128xf32>
    %c0_5 = arith.constant 0 : index
    %c0_6 = arith.constant 0 : index
    %9 = vector.load %arg4[%c0_5, %c0_6] : memref<1x128xf32, #tpu.memory_space<vmem>>, vector<1x128xf32>
    %10 = vector.broadcast %9 : vector<1x128xf32> to vector<8x128xf32>
    %11 = arith.addf %8, %10 : vector<8x128xf32>
    %c0_7 = arith.constant 0 : index
    %c0_8 = arith.constant 0 : index
    %12 = vector.load %arg5[%c0_7, %c0_8] : memref<1x128xf32, #tpu.memory_space<vmem>>, vector<1x128xf32>
    %13 = vector.broadcast %6 : vector<8x1xf32> to vector<8x128xf32>
    %14 = vector.broadcast %12 : vector<1x128xf32> to vector<8x128xf32>
    %15 = arith.mulf %13, %14 : vector<8x128xf32>
    %16 = arith.addf %11, %15 : vector<8x128xf32>
    %17 = math.exp %16 : vector<8x128xf32>
    %c0_9 = arith.constant 0 : index
    %c0_10 = arith.constant 0 : index
    %18 = vector.load %arg9[%c0_9, %c0_10] : memref<8x1xf32, #tpu.memory_space<vmem>>, vector<8x1xf32>
    %c0_11 = arith.constant 0 : index
    %c0_12 = arith.constant 0 : index
    %19 = vector.load %arg6[%c0_11, %c0_12] : memref<1x128xf32, #tpu.memory_space<vmem>>, vector<1x128xf32>
    %20 = vector.broadcast %19 : vector<1x128xf32> to vector<8x128xf32>
    %21 = arith.mulf %17, %20 : vector<8x128xf32>
    %cst_13 = arith.constant dense<0.000000e+00> : vector<8xf32>
    %22 = vector.multi_reduction <add>, %21, %cst_13 [1] : vector<8x128xf32> to vector<8xf32>
    %23 = vector.shape_cast %22 : vector<8xf32> to vector<8x1xf32>
    %24 = arith.addf %18, %23 : vector<8x1xf32>
    %c0_14 = arith.constant 0 : index
    %c0_15 = arith.constant 0 : index
    %25 = vector.load %arg9[%c0_14, %c0_15] : memref<8x1xf32, #tpu.memory_space<vmem>>, vector<8x1xf32>
    tpu.vector_store %arg9[%c0_14, %c0_15], %24 {strides = array<i32>} : memref<8x1xf32, #tpu.memory_space<vmem>>, vector<8x1xf32>,
    %c0_i32_16 = arith.constant 0 : i32
    %26 = arith.cmpi eq, %arg1, %c0_i32_16 : i32
    %27 = arith.extui %26 : i1 to i32
    %c0_i32_17 = arith.constant 0 : i32
    %28 = arith.cmpi ne, %27, %c0_i32_17 : i32
    scf.if %28 {
      %c0_18 = arith.constant 0 : index
      %c0_19 = arith.constant 0 : index
      %29 = vector.load %arg9[%c0_18, %c0_19] : memref<8x1xf32, #tpu.memory_space<vmem>>, vector<8x1xf32>
      %c0_20 = arith.constant 0 : index
      %c0_21 = arith.constant 0 : index
      %30 = vector.load %arg7[%c0_20, %c0_21] : memref<1x1xf32, #tpu.memory_space<vmem>>, vector<1x1xf32>
      %31 = vector.broadcast %30 : vector<1x1xf32> to vector<8x1xf32>
      %32 = arith.addf %29, %31 : vector<8x1xf32>
      %c0_22 = arith.constant 0 : index
      %c0_23 = arith.constant 0 : index
      %33 = vector.load %arg8[%c0_22, %c0_23] : memref<8x1xf32, #tpu.memory_space<vmem>>, vector<8x1xf32>
      tpu.vector_store %arg8[%c0_22, %c0_23], %32 {strides = array<i32>} : memref<8x1xf32, #tpu.memory_space<vmem>>, vector<8x1xf32>,
    } else {
    }
    return
  }
  func.func @transform_0(%arg0: i32, %arg1: i32) -> (i32, i32) {
    %c0_i32 = arith.constant 0 : i32
    %c0_i32_0 = arith.constant 0 : i32
    return %arg0, %c0_i32 : i32, i32
  }
  func.func @transform_1(%arg0: i32, %arg1: i32) -> (i32, i32) {
    %c0_i32 = arith.constant 0 : i32
    %c0_i32_0 = arith.constant 0 : i32
    return %c0_i32, %arg1 : i32, i32
  }
  func.func @transform_2(%arg0: i32, %arg1: i32) -> (i32, i32) {
    %c0_i32 = arith.constant 0 : i32
    %c0_i32_0 = arith.constant 0 : i32
    return %c0_i32, %arg1 : i32, i32
  }
  func.func @transform_3(%arg0: i32, %arg1: i32) -> (i32, i32) {
    %c0_i32 = arith.constant 0 : i32
    %c0_i32_0 = arith.constant 0 : i32
    return %c0_i32, %arg1 : i32, i32
  }
  func.func @transform_4(%arg0: i32, %arg1: i32) -> (i32, i32) {
    %c0_i32 = arith.constant 0 : i32
    %c0_i32_0 = arith.constant 0 : i32
    return %c0_i32, %arg1 : i32, i32
  }
  func.func @transform_5(%arg0: i32, %arg1: i32) -> (i32, i32) {
    %c0_i32 = arith.constant 0 : i32
    %c0_i32_0 = arith.constant 0 : i32
    %c0_i32_1 = arith.constant 0 : i32
    return %c0_i32, %c0_i32_0 : i32, i32
  }
  func.func @transform_6(%arg0: i32, %arg1: i32) -> (i32, i32) {
    %c0_i32 = arith.constant 0 : i32
    %c0_i32_0 = arith.constant 0 : i32
    return %arg0, %c0_i32 : i32, i32
  }
}

</mosaic_0001>

<llo_original>
// kernel: tpu_custom_call.1
$region0: #{tpu_custom_call.1}
  #allocation0 [shape = 'u32[]', space=smem, size = 0x4, offset = 0x4, fixed_abs, tag = 'smem constant byte address 0x4 - core index']
  #allocation1 [shape = 'u32[144,128]{1,0:T(1,128)}', space=vmem, size = 0x12000, scoped, tag = 'internal scratch']
  #allocation2 [shape = 'f32[8,1]{1,0:T(8,128)}', space=vmem, size = 0x1000, scoped, tag = 'scratch operand']
  #allocation3 [shape = 'f32[1,1]{1,0:T(1,128)S(1)}', space=vmem, size = 0x200, scoped, tag = 'scoped memory for tpu_custom_call.1']
  %s0 = inlined_call_operand.vmem [shape: f32[8,4], index: 0, kind: input, shape index: {}]
  %s1 = inlined_call_operand.vmem [shape: f32[4,128], index: 1, kind: input, shape index: {}]
  %s2 = inlined_call_operand.vmem [shape: f32[1,128], index: 2, kind: input, shape index: {}]
  %s3 = inlined_call_operand.vmem [shape: f32[1,128], index: 3, kind: input, shape index: {}]
  %s4 = inlined_call_operand.vmem [shape: f32[1,128], index: 4, kind: input, shape index: {}]
  %s5 = inlined_call_operand.<no memory space> [shape: f32[1,1], index: 5, kind: input, shape index: {}]
  %s6 = inlined_call_operand.vmem [shape: f32[8,1], index: 6, kind: output, shape index: {}]
  %s7 = sld [smem:[#allocation0]]
  $region42: #{tpu_custom_call.1} parent=0
    _
  %s9 = ssub.s32 1, %s7
  %s10 = scalar_select 0, %s9, %s7
  %v11 = vstv %s5
  %12 = vst [vmem:[#allocation3] sm:$0x1] %v11
  // Predicated region
  $region2: #{tpu_custom_call.1} parent=0 // pred_check
    _
  $region3: #{tpu_custom_call.1} parent=0 // pred_check_branch
    %14 = sbr.rel (0) target = $region5
  $region4: #{tpu_custom_call.1} parent=0 // pred_region
    _
  $region5: #{tpu_custom_call.1} parent=0 // pred_fallthru
    _
  // Predicated region
  $region6: #{tpu_custom_call.1} parent=0 // pred_check
    _
  $region7: #{tpu_custom_call.1} parent=0 // pred_check_branch
    %16 = sbr.rel (0) target = $region9
  $region8: #{tpu_custom_call.1} parent=0 // pred_region
    _
  $region9: #{tpu_custom_call.1} parent=0 // pred_fallthru
    _
  // Predicated region
  $region10: #{tpu_custom_call.1} parent=0 // pred_check
    _
  $region11: #{tpu_custom_call.1} parent=0 // pred_check_branch
    %18 = sbr.rel (0) target = $region13
  $region12: #{tpu_custom_call.1} parent=0 // pred_region
    _
  $region13: #{tpu_custom_call.1} parent=0 // pred_fallthru
    _
  // Predicated region
  $region14: #{tpu_custom_call.1} parent=0 // pred_check
    _
  $region15: #{tpu_custom_call.1} parent=0 // pred_check_branch
    %20 = sbr.rel (0) target = $region17
  $region16: #{tpu_custom_call.1} parent=0 // pred_region
    _
  $region17: #{tpu_custom_call.1} parent=0 // pred_fallthru
    _
  // Predicated region
  $region18: #{tpu_custom_call.1} parent=0 // pred_check
    _
  $region19: #{tpu_custom_call.1} parent=0 // pred_check_branch
    %22 = sbr.rel (0) target = $region21
  $region20: #{tpu_custom_call.1} parent=0 // pred_region
    _
  $region21: #{tpu_custom_call.1} parent=0 // pred_fallthru
    _
  // Predicated region
  $region22: #{tpu_custom_call.1} parent=0 // pred_check
    _
  $region23: #{tpu_custom_call.1} parent=0 // pred_check_branch
    %24 = sbr.rel (0) target = $region25
  $region24: #{tpu_custom_call.1} parent=0 // pred_region
    _
  $region25: #{tpu_custom_call.1} parent=0 // pred_fallthru
    _
  %p25 = scmp.eq.s32.totalorder 0, 0
  // Predicated region
  $region26: #{tpu_custom_call.1} parent=0 // pred_check
    %p26 = pneg %p25
  $region27: #{tpu_custom_call.1} parent=0 // pred_check_branch
    %28 = sbr.rel (%p26) target = $region29
  $region28: #{tpu_custom_call.1} parent=0 // pred_region
    %vm29 = vcmask 7168
    %30 = vst.msk [vmem:[#allocation2] sm:$0xff] %vm29, 0.0
  $region29: #{tpu_custom_call.1} parent=0 // pred_fallthru
    _
  %v31 = vld [vmem:[%s0] sm:$0xff]
  %v32 = vmul.f32 %v31, %v31
  %vm33 = vcmask 31744
  %v34 = vsel %vm33, %v32, 0.0
  %35 = vadd.xlane.f32.xlu0 %v34
  %v36 = vpop.xlane.xlu0 %35
  %v37 = vld [vmem:[%s1] sm:$0xf]
  %v38 = vld [vmem:[%s2] sm:$0x1]
  %v40 = vlaneseq
  %v41 = vshrl.u32 %v40, 7
  %v42 = vsub.s32 0, %v41
  %v43 = vrot.slane %v38, %v42
  %v46 = vsel %vm33, %v31, 0
  %vm48 = vcmask 1043456
  %v50 = vsel %vm48, %v37, 0
  %52 = vmatprep.subr.mxu0 0.0
  %53 = vmatpush1.msra.mxu0 %v50
  %54 = vmatprep.subr.mxu0 0.0
  %55 = vmatpush1.msra.mxu0 0.0
  %56 = vmatprep.subr.mxu0 0.0
  %57 = vmatpush1.msra.mxu0 0.0
  %58 = vmatprep.subr.mxu0 0.0
  %59 = vmatpush1.msra.mxu0 0.0
  %60 = vmatprep.subr.mxu0 0.0
  %61 = vmatpush1.msra.mxu0 0.0
  %62 = vmatprep.subr.mxu0 0.0
  %63 = vmatpush1.msra.mxu0 0.0
  %64 = vmatprep.subr.mxu0 0.0
  %65 = vmatpush1.msra.mxu0 0.0
  %66 = vmatprep.subr.mxu0 0.0
  %67 = vmatpush1.msra.mxu0 0.0
  %68 = vmatprep.subr.mxu0 0.0
  %69 = vmatpush1.msra.mxu0 0.0
  %70 = vmatprep.subr.mxu0 0.0
  %71 = vmatpush1.msra.mxu0 0.0
  %72 = vmatprep.subr.mxu0 0.0
  %73 = vmatpush1.msra.mxu0 0.0
  %74 = vmatprep.subr.mxu0 0.0
  %75 = vmatpush1.msra.mxu0 0.0
  %76 = vmatprep.subr.mxu0 0.0
  %77 = vmatpush1.msra.mxu0 0.0
  %78 = vmatprep.subr.mxu0 0.0
  %79 = vmatpush1.msra.mxu0 0.0
  %80 = vmatprep.subr.mxu0 0.0
  %81 = vmatpush1.msra.mxu0 0.0
  %82 = vmatprep.subr.mxu0 0.0
  %83 = vmatpush1.msra.mxu0 0.0
  %84 = vmatprep.subr.mxu0 0.0
  %85 = vmatpush1.msra.mxu0 0.0
  %86 = vmatprep.subr.mxu0 0.0
  %87 = vmatpush1.msra.mxu0 0.0
  %88 = vmatprep.subr.mxu0 0.0
  %89 = vmatpush1.msra.mxu0 0.0
  %90 = vmatprep.subr.mxu0 0.0
  %91 = vmatpush1.msra.mxu0 0.0
  %92 = vmatprep.subr.mxu0 0.0
  %93 = vmatpush1.msra.mxu0 0.0
  %94 = vmatprep.subr.mxu0 0.0
  %95 = vmatpush1.msra.mxu0 0.0
  %96 = vmatprep.subr.mxu0 0.0
  %97 = vmatpush1.msra.mxu0 0.0
  %98 = vmatprep.subr.mxu0 0.0
  %99 = vmatpush1.msra.mxu0 0.0
  %100 = vmatprep.subr.mxu0 0.0
  %101 = vmatpush1.msra.mxu0 0.0
  %102 = vmatprep.subr.mxu0 0.0
  %103 = vmatpush1.msra.mxu0 0.0
  %104 = vmatprep.subr.mxu0 0.0
  %105 = vmatpush1.msra.mxu0 0.0
  %106 = vmatprep.subr.mxu0 0.0
  %107 = vmatpush1.msra.mxu0 0.0
  %108 = vmatprep.subr.mxu0 0.0
  %109 = vmatpush1.msra.mxu0 0.0
  %110 = vmatprep.subr.mxu0 0.0
  %111 = vmatpush1.msra.mxu0 0.0
  %112 = vmatprep.subr.mxu0 0.0
  %113 = vmatpush1.msra.mxu0 0.0
  %114 = vmatprep.subr.mxu0 0.0
  %115 = vmatpush1.msra.mxu0 0.0
  %116 = vmatprep.mubr.f32.mxu0 0.0
  %117 = vmatmul.mubr.f32.gmra.mrb[0].mxu0 %v46
  %v118 = vpop.f32.mrb[0].mxu0
  %v119 = vadd.f32 %v43, %v118
  %v120 = vpop.f32.mrb[0].mxu0
  %121 = vdwg.mxu0
  %v122 = vld [vmem:[%s3] sm:$0x1]
  %v124 = vlaneseq
  %v125 = vshrl.u32 %v124, 7
  %v126 = vsub.s32 0, %v125
  %v127 = vrot.slane %v122, %v126
  %v129 = vmul.f32 %v36, %v127
  %v130 = vadd.f32 %v119, %v129
  %v131 = vmul.f32 %v130, 1.442695
  %v132 = vpow.pop %v131
  %v133 = vld [vmem:[#allocation2] sm:$0xff]
  %v134 = vld [vmem:[%s4] sm:$0x1]
  %v136 = vlaneseq
  %v137 = vshrl.u32 %v136, 7
  %v138 = vsub.s32 0, %v137
  %v139 = vrot.slane %v134, %v138
  %v141 = vmul.f32 %v132, %v139
  %142 = vadd.xlane.f32.xlu0 %v141
  %v143 = vpop.xlane.xlu0 %142
  %v144 = vadd.f32 %v133, %v143
  %vm145 = vcmask 7168
  %146 = vst.msk [vmem:[#allocation2] sm:$0xff] %vm145, %v144
  // Predicated region
  $region30: #{tpu_custom_call.1} parent=0 // pred_check
    %p147 = pneg %p25
  $region31: #{tpu_custom_call.1} parent=0 // pred_check_branch
    %149 = sbr.rel (%p147) target = $region33
  $region32: #{tpu_custom_call.1} parent=0 // pred_region
    %v150 = vld [vmem:[#allocation2] sm:$0xff]
    %v151 = vld [vmem:[#allocation3] sm:$0x1]
    %v153 = vlaneseq
    %v154 = vshrl.u32 %v153, 7
    %v155 = vsub.s32 0, %v154
    %v156 = vrot.slane %v151, %v155
    %v158 = vadd.f32 %v150, %v156
    %159 = vst.msk [vmem:[%s6] sm:$0xff] %vm145, %v158
  $region33: #{tpu_custom_call.1} parent=0 // pred_fallthru
    _
  // Predicated region
  $region34: #{tpu_custom_call.1} parent=0 // pred_check
    _
  $region35: #{tpu_custom_call.1} parent=0 // pred_check_branch
    %161 = sbr.rel (0) target = $region37
  $region36: #{tpu_custom_call.1} parent=0 // pred_region
    _
  $region37: #{tpu_custom_call.1} parent=0 // pred_fallthru
    _
  // Predicated region
  $region38: #{tpu_custom_call.1} parent=0 // pred_check
    _
  $region39: #{tpu_custom_call.1} parent=0 // pred_check_branch
    %163 = sbr.rel (0) target = $region41
  $region40: #{tpu_custom_call.1} parent=0 // pred_region
    _
  $region41: #{tpu_custom_call.1} parent=0 // pred_fallthru
    _

</llo_original>
